<compile_context>
chip_gen: v6e
topology: v6e:2x2x1
jax: 0.10.0
libtpu: 0.0.40
codegen_flags: <defaults>
</compile_context>

<pallas_src>
import math

import jax
import jax.numpy as jnp
from jax.experimental import pallas as pl
from jax.experimental.pallas import tpu as pltpu


def _t2v_kernel(tau_ref, wT_ref, b_ref, mask_ref, o_ref):
    # tau_ref : (TILE, P*F_in)      wT_ref : (P*F_in, P*F_out)
    # b_ref   : (1, P*F_out)        mask_ref: (1, P*F_out) f32 {0,1}
    # o_ref   : (TILE, P*F_out)
    z = jnp.dot(tau_ref[...], wT_ref[...], preferred_element_type=jnp.float32)
    z = z + b_ref[...]                       # broadcast bias over rows
    # sin (VPU polynomial) on "sine" columns, identity on the per-group last
    # column; the select is a cheap VPU op on a resident mask.
    out = jnp.where(mask_ref[...] != 0.0, jnp.sin(z), z)
    o_ref[...] = out.astype(o_ref.dtype)


def _pick_pack(n, f_in, f_out):
    """Fold `pack` logical rows into one kernel row so P*F_out % 128 == 0."""
    if f_out % 128 == 0:
        return 1                                  # already lane-dense
    cand = 128 // math.gcd(f_out, 128)            # = lcm(f_out, 128) // f_out
    if n % cand == 0 and cand * f_in <= 2048 and cand * f_out <= 2048:
        return cand
    return 1


def _pick_tile(rows, f_in_p, f_out_p, out_itemsize, tile_cap):
    """Largest multiple-of-8 row tile whose double-buffered footprint fits a
    conservative VMEM budget, capped so large batches keep >=4 grid steps
    (lets v7x's two TensorCores split the 'parallel' row axis)."""
    per_row = 2 * (f_in_p * 4 + f_out_p * out_itemsize)   # 2-deep pipeline bytes/row
    budget = 12 * 1024 * 1024                              # < v5e's 16 MiB scoped default
    vmem_tile = max(8, min(tile_cap, (budget // per_row) // 8 * 8))
    tile = min(vmem_tile, rows)
    if rows >= 64:
        quarter = max(8, (rows // 4) // 8 * 8)
        tile = min(tile, quarter)
    return tile


def time2vec_forward(tau, w, b, w0, b0, *, tile_rows=8192, out_dtype=jnp.float32):
    """tau: (N, in_features) f32. Returns (N, out_features) in out_dtype."""
    n, f_in = tau.shape
    f_out = w.shape[0] + 1

    # Combined weight/bias (plain-JAX glue):  z = tau @ W_all.T + b_all
    w_all = jnp.concatenate([w, w0], axis=0)                        # (F_out, F_in)
    b_all = jnp.concatenate([b, b0], axis=0).reshape(1, f_out)      # (1, F_out)
    wT = w_all.T.astype(jnp.float32)                                # (F_in, F_out)

    # --- Lane-dense packing: fold P rows into one kernel row so the output
    # last dim becomes a multiple of 128 (unmasked stores) for arbitrary F_out.
    pack = _pick_pack(n, f_in, f_out)
    f_in_p = pack * f_in
    f_out_p = pack * f_out
    rows = n // pack

    tau_p = tau.astype(jnp.float32).reshape(rows, f_in_p)           # free reshape
    if pack > 1:
        # Block-diagonal weight: kron(I_P, W.T) -> (P*F_in, P*F_out)
        wT_p = jnp.kron(jnp.eye(pack, dtype=jnp.float32), wT)
    else:
        wT_p = wT
    b_p = jnp.tile(b_all.astype(jnp.float32), (1, pack))            # (1, P*F_out)
    col = jnp.arange(f_out_p, dtype=jnp.int32) % f_out
    mask_p = (col < (f_out - 1)).astype(jnp.float32).reshape(1, f_out_p)

    out_itemsize = jnp.dtype(out_dtype).itemsize
    tile = _pick_tile(rows, f_in_p, f_out_p, out_itemsize, tile_rows)
    grid = (pl.cdiv(rows, tile),)

    # Actual MXU work includes the kron zeros -> pack * (2*n*f_in*f_out).
    cost = pl.CostEstimate(
        flops=2 * rows * f_in_p * f_out_p,
        transcendentals=rows * f_out_p,
        bytes_accessed=(4 * n * f_in + out_itemsize * n * f_out
                        + 4 * (f_in_p * f_out_p + 2 * f_out_p)),
    )

    out_p = pl.pallas_call(
        _t2v_kernel,
        out_shape=jax.ShapeDtypeStruct((rows, f_out_p), out_dtype),
        grid_spec=pl.GridSpec(
            grid=grid,
            in_specs=[
                pl.BlockSpec((tile, f_in_p), lambda i: (i, 0)),      # tau: strided
                pl.BlockSpec((f_in_p, f_out_p), lambda i: (0, 0)),   # weights: resident
                pl.BlockSpec((1, f_out_p), lambda i: (0, 0)),        # bias: resident
                pl.BlockSpec((1, f_out_p), lambda i: (0, 0)),        # mask: resident
            ],
            out_specs=pl.BlockSpec((tile, f_out_p), lambda i: (i, 0)),
        ),
        compiler_params=pltpu.CompilerParams(
            dimension_semantics=("parallel",),  # shard row axis across v7x's 2 TCs
        ),
        cost_estimate=cost,
    )(tau_p, wT_p, b_p, mask_p)

    return out_p.reshape(n, f_out)


def _reference(tau, w, b, w0, b0):
    v1 = jnp.sin(jnp.matmul(w, tau.T) + b)      # (F_out-1, N)
    v2 = jnp.matmul(w0, tau.T) + b0             # (1, N)
    return jnp.concatenate([v1, v2], axis=0).T  # (N, F_out)


def _make_params(key, f_in, f_out):
    k_w0, k_b0, k_w, k_b = jax.random.split(key, 4)
    w0 = jax.random.normal(k_w0, (1, f_in), dtype=jnp.float32)
    b0 = jax.random.normal(k_b0, (1, 1), dtype=jnp.float32)
    w = jax.random.normal(k_w, (f_out - 1, f_in), dtype=jnp.float32)
    b = jax.random.normal(k_b, (f_out - 1, 1), dtype=jnp.float32)
    return w, b, w0, b0


if __name__ == "__main__":
    key = jax.random.PRNGKey(0)
    k_p1, k_t1, k_t2, k_p3, k_t3, k_p4, k_t4 = jax.random.split(key, 7)

    # Check 1: small batch, F_out=32 (pack=4 lane-dense path, single tile).
    IN_FEATURES, OUT_FEATURES, N = 8, 32, 8
    w, b, w0, b0 = _make_params(k_p1, IN_FEATURES, OUT_FEATURES)
    tau = jax.random.normal(k_t1, (N, IN_FEATURES), dtype=jnp.float32)
    out = jax.block_until_ready(time2vec_forward(tau, w, b, w0, b0))
    ref = _reference(tau, w, b, w0, b0)
    assert out.shape == (N, OUT_FEATURES)
    assert jnp.allclose(out, ref, atol=1e-5, rtol=1e-5)

    # Check 2: larger batch, small tile -> multi-step row pipeline (>=4 grid steps).
    N2 = 1024
    tau2 = jax.random.normal(k_t2, (N2, IN_FEATURES), dtype=jnp.float32)
    out2 = jax.block_until_ready(time2vec_forward(tau2, w, b, w0, b0, tile_rows=64))
    ref2 = _reference(tau2, w, b, w0, b0)
    assert out2.shape == (N2, OUT_FEATURES)
    assert jnp.allclose(out2, ref2, atol=1e-5, rtol=1e-5)

    # Check 3: F_out that does not divide 128 (48 -> pack=8 via lcm packing).
    w3, b3, w03, b03 = _make_params(k_p3, IN_FEATURES, 48)
    tau3 = jax.random.normal(k_t3, (16, IN_FEATURES), dtype=jnp.float32)
    out3 = jax.block_until_ready(time2vec_forward(tau3, w3, b3, w03, b03))
    ref3 = _reference(tau3, w3, b3, w03, b03)
    assert out3.shape == (16, 48)
    assert jnp.allclose(out3, ref3, atol=1e-5, rtol=1e-5)

    # Check 4: un-packable shapes (pack falls back to 1, masked-store path) and
    # the optional bf16 output stream.
    w4, b4, w04, b04 = _make_params(k_p4, IN_FEATURES, 33)
    tau4 = jax.random.normal(k_t4, (9, IN_FEATURES), dtype=jnp.float32)
    out4 = jax.block_until_ready(time2vec_forward(tau4, w4, b4, w04, b04))
    ref4 = _reference(tau4, w4, b4, w04, b04)
    assert out4.shape == (9, 33)
    assert jnp.allclose(out4, ref4, atol=1e-5, rtol=1e-5)

    out_bf16 = jax.block_until_ready(
        time2vec_forward(tau2, w, b, w0, b0, out_dtype=jnp.bfloat16)
    )
    assert out_bf16.dtype == jnp.bfloat16
    assert jnp.allclose(out_bf16.astype(jnp.float32), ref2, atol=3e-2, rtol=3e-2)

    print("KERNEL_OK")
</pallas_src>

<mosaic_0001>
module attributes {stable_mosaic.version = 11 : i64} {
  func.func @_t2v_kernel(%arg0: i32, %arg1: memref<2x32xf32, #tpu.memory_space<vmem>>, %arg2: memref<32x128xf32, #tpu.memory_space<vmem>>, %arg3: memref<1x128xf32, #tpu.memory_space<vmem>>, %arg4: memref<1x128xf32, #tpu.memory_space<vmem>>, %arg5: memref<2x128xf32, #tpu.memory_space<vmem>>) attributes {dimension_semantics = [#tpu.dimension_semantics<parallel>], iteration_bounds = array<i64: 1>, scalar_prefetch = 0 : i64, scratch_operands = 0 : i64, tpu.core_type = #tpu.core_type<tc>, window_params = [{transform_indices = @transform_0, window_bounds = array<i64: 2, 32>}, {pipeline_mode = #tpu.pipeline_mode<synchronous>, transform_indices = @transform_1, window_bounds = array<i64: 32, 128>}, {pipeline_mode = #tpu.pipeline_mode<synchronous>, transform_indices = @transform_2, window_bounds = array<i64: 1, 128>}, {pipeline_mode = #tpu.pipeline_mode<synchronous>, transform_indices = @transform_3, window_bounds = array<i64: 1, 128>}, {transform_indices = @transform_4, window_bounds = array<i64: 2, 128>}]} {
    %c0 = arith.constant 0 : index
    %c0_0 = arith.constant 0 : index
    %0 = vector.load %arg1[%c0, %c0_0] : memref<2x32xf32, #tpu.memory_space<vmem>>, vector<2x32xf32>
    %c0_1 = arith.constant 0 : index
    %c0_2 = arith.constant 0 : index
    %1 = vector.load %arg2[%c0_1, %c0_2] : memref<32x128xf32, #tpu.memory_space<vmem>>, vector<32x128xf32>
    %cst = arith.constant dense<0.000000e+00> : vector<2x128xf32>
    %2 = tpu.matmul %0, %1, %cst {dimension_numbers = #tpu.dot_dimension_numbers<[1], [0], [0], [1], [0, 0, 1, 1], [], []>} : vector<2x32xf32>, vector<32x128xf32>, vector<2x128xf32> -> vector<2x128xf32>
    %c0_3 = arith.constant 0 : index
    %c0_4 = arith.constant 0 : index
    %3 = vector.load %arg3[%c0_3, %c0_4] : memref<1x128xf32, #tpu.memory_space<vmem>>, vector<1x128xf32>
    %4 = vector.broadcast %3 : vector<1x128xf32> to vector<2x128xf32>
    %5 = arith.addf %2, %4 : vector<2x128xf32>
    %c0_5 = arith.constant 0 : index
    %c0_6 = arith.constant 0 : index
    %6 = vector.load %arg4[%c0_5, %c0_6] : memref<1x128xf32, #tpu.memory_space<vmem>>, vector<1x128xf32>
    %cst_7 = arith.constant 0.000000e+00 : f32
    %7 = vector.broadcast %cst_7 : f32 to vector<1x128xf32>
    %8 = arith.cmpf one, %6, %7 : vector<1x128xf32>
    %9 = math.sin %5 : vector<2x128xf32>
    %10 = vector.shape_cast %8 : vector<1x128xi1> to vector<1x128xi1>
    %11 = vector.broadcast %10 : vector<1x128xi1> to vector<2x128xi1>
    %12 = arith.select %11, %9, %5 : vector<2x128xi1>, vector<2x128xf32>
    %c0_8 = arith.constant 0 : index
    %c0_9 = arith.constant 0 : index
    %13 = vector.load %arg5[%c0_8, %c0_9] : memref<2x128xf32, #tpu.memory_space<vmem>>, vector<2x128xf32>
    tpu.vector_store %arg5[%c0_8, %c0_9], %12 {strides = array<i32>} : memref<2x128xf32, #tpu.memory_space<vmem>>, vector<2x128xf32>,
    return
  }
  func.func @transform_0(%arg0: i32) -> (i32, i32) {
    %c0_i32 = arith.constant 0 : i32
    %c0_i32_0 = arith.constant 0 : i32
    return %arg0, %c0_i32 : i32, i32
  }
  func.func @transform_1(%arg0: i32) -> (i32, i32) {
    %c0_i32 = arith.constant 0 : i32
    %c0_i32_0 = arith.constant 0 : i32
    %c0_i32_1 = arith.constant 0 : i32
    return %c0_i32, %c0_i32_0 : i32, i32
  }
  func.func @transform_2(%arg0: i32) -> (i32, i32) {
    %c0_i32 = arith.constant 0 : i32
    %c0_i32_0 = arith.constant 0 : i32
    %c0_i32_1 = arith.constant 0 : i32
    return %c0_i32, %c0_i32_0 : i32, i32
  }
  func.func @transform_3(%arg0: i32) -> (i32, i32) {
    %c0_i32 = arith.constant 0 : i32
    %c0_i32_0 = arith.constant 0 : i32
    %c0_i32_1 = arith.constant 0 : i32
    return %c0_i32, %c0_i32_0 : i32, i32
  }
  func.func @transform_4(%arg0: i32) -> (i32, i32) {
    %c0_i32 = arith.constant 0 : i32
    %c0_i32_0 = arith.constant 0 : i32
    return %arg0, %c0_i32 : i32, i32
  }
}

</mosaic_0001>

<llo_original>
// kernel: tpu_custom_call.1
$region0: #{tpu_custom_call.1}
  #allocation0 [shape = 'u32[]', space=smem, size = 0x4, offset = 0x4, fixed_abs, tag = 'smem constant byte address 0x4 - core index']
  #allocation1 [shape = 'u32[144,128]{1,0:T(1,128)}', space=vmem, size = 0x12000, scoped, tag = 'internal scratch']
  %s0 = inlined_call_operand.hbm [shape: f32[2,32], index: 0, kind: input, shape index: {}]
  %s1 = inlined_call_operand.hbm [shape: f32[32,128], index: 1, kind: input, shape index: {}]
  %s2 = inlined_call_operand.vmem [shape: f32[1,128], index: 2, kind: input, shape index: {}]
  %s3 = inlined_call_operand.vmem [shape: f32[1,128], index: 3, kind: input, shape index: {}]
  %s4 = inlined_call_operand.hbm [shape: f32[2,128], index: 4, kind: output, shape index: {}]
  %s5 = sld [smem:[#allocation0]]
  $region34: #{tpu_custom_call.1} parent=0
    _
  %s7 = ssub.s32 1, %s5
  %s8 = scalar_select 0, %s7, %s5
  $region1: #{tpu_custom_call.1} parent=0
    #allocation2 [shape = 'u8[1024]{0}', space=vmem, size = 0x400, scoped, tag = 'input window, operand 0, single buffered']
    #allocation3 [shape = 's32[1]{0}', space=sflag, size = 0x4, scoped, tag = 'scoped memory for tpu_custom_call.1']
    #allocation4 [shape = 's32[1]{0}', space=sflag, size = 0x4, scoped, tag = 'scoped memory for tpu_custom_call.1']
    #allocation5 [shape = 'u8[16384]{0}', space=vmem, size = 0x4000, scoped, tag = 'input window, operand 1, single buffered']
    #allocation6 [shape = 's32[1]{0}', space=sflag, size = 0x4, scoped, tag = 'scoped memory for tpu_custom_call.1']
    #allocation7 [shape = 'u8[1024]{0}', space=vmem, size = 0x400, scoped, tag = 'output window, operand 0, single buffered']
    %9 = vsyncpa [#allocation3], 0
    %10 = vsyncpa [#allocation6], 0
    %11 = vsyncpa [#allocation4], 0
    // Predicated region
    $region2: #{tpu_custom_call.1} parent=1 // pred_check
      _
    $region3: #{tpu_custom_call.1} parent=1 // pred_check_branch
      %13 = sbr.rel (0) target = $region5
    $region4: #{tpu_custom_call.1} parent=1 // pred_region
      %s15 = ssub.s32 32, 32
      %16 = vsyncadd [#allocation3], %s15
      %s18 = sshll.u32 [#allocation2], 4
      %s19 = int_to_ptr.vmem [resolvable:$true] %s18
      %21 = dma.hbm_to_vmem [thread:$0]  %s0, 32, %s19, [#allocation3]
    $region5: #{tpu_custom_call.1} parent=1 // pred_fallthru
      _
    // Predicated region
    $region6: #{tpu_custom_call.1} parent=1 // pred_check
      _
    $region7: #{tpu_custom_call.1} parent=1 // pred_check_branch
      %23 = sbr.rel (0) target = $region9
    $region8: #{tpu_custom_call.1} parent=1 // pred_region
      %s25 = ssub.s32 512, 512
      %26 = vsyncadd [#allocation6], %s25
      %s27 = sshll.u32 [#allocation5], 4
      %s28 = int_to_ptr.vmem [resolvable:$true] %s27
      %33 = dma.hbm_to_vmem [thread:$0]  %s1, 512, %s28, [#allocation6], 128, 128, 8
    $region9: #{tpu_custom_call.1} parent=1 // pred_fallthru
      _
    // Predicated region
    $region10: #{tpu_custom_call.1} parent=1 // pred_check
      _
    $region11: #{tpu_custom_call.1} parent=1 // pred_check_branch
      %35 = sbr.rel (0) target = $region13
    $region12: #{tpu_custom_call.1} parent=1 // pred_region
      _
    $region13: #{tpu_custom_call.1} parent=1 // pred_fallthru
      _
    // Predicated region
    $region14: #{tpu_custom_call.1} parent=1 // pred_check
      _
    $region15: #{tpu_custom_call.1} parent=1 // pred_check_branch
      %37 = sbr.rel (0) target = $region17
    $region16: #{tpu_custom_call.1} parent=1 // pred_region
      _
    $region17: #{tpu_custom_call.1} parent=1 // pred_fallthru
      _
    // Predicated region
    $region18: #{tpu_custom_call.1} parent=1 // pred_check
      _
    $region19: #{tpu_custom_call.1} parent=1 // pred_check_branch
      %39 = sbr.rel (0) target = $region21
    $region20: #{tpu_custom_call.1} parent=1 // pred_region
      %40 = dma.done [#allocation3], 32
    $region21: #{tpu_custom_call.1} parent=1 // pred_fallthru
      _
    // Predicated region
    $region22: #{tpu_custom_call.1} parent=1 // pred_check
      _
    $region23: #{tpu_custom_call.1} parent=1 // pred_check_branch
      %42 = sbr.rel (0) target = $region25
    $region24: #{tpu_custom_call.1} parent=1 // pred_region
      %43 = dma.done [#allocation6], 512
    $region25: #{tpu_custom_call.1} parent=1 // pred_fallthru
      _
    %v44 = vld [vmem:[#allocation2] sm:$0x3]
    %v45 = vld [vmem:[#allocation5] sm:$0xff]
    %v46 = vld [vmem:[#allocation5 + $0x8] sm:$0xff]
    %v47 = vld [vmem:[#allocation5 + $0x10] sm:$0xff]
    %v48 = vld [vmem:[#allocation5 + $0x18] sm:$0xff]
    %v49 = vld [vmem:[%s2] sm:$0x1]
    %v51 = vlaneseq
    %v52 = vshrl.u32 %v51, 7
    %v53 = vsub.s32 0, %v52
    %v54 = vrot.slane %v49, %v53
    %vm56 = vcmask 261120
    %v58 = vsel %vm56, %v44, 0
    %60 = vmatprep.subr.mxu0 0.0
    %61 = vmatpush1.msra.mxu0 0.0
    %62 = vmatprep.subr.mxu0 0.0
    %63 = vmatpush1.msra.mxu0 0.0
    %64 = vmatprep.subr.mxu0 0.0
    %65 = vmatpush1.msra.mxu0 0.0
    %66 = vmatprep.subr.mxu0 0.0
    %67 = vmatpush1.msra.mxu0 0.0
    %68 = vmatprep.subr.mxu0 0.0
    %69 = vmatpush1.msra.mxu0 0.0
    %70 = vmatprep.subr.mxu0 0.0
    %71 = vmatpush1.msra.mxu0 0.0
    %72 = vmatprep.subr.mxu0 0.0
    %73 = vmatpush1.msra.mxu0 0.0
    %74 = vmatprep.subr.mxu0 0.0
    %75 = vmatpush1.msra.mxu0 0.0
    %76 = vmatprep.subr.mxu0 0.0
    %77 = vmatpush1.msra.mxu0 0.0
    %78 = vmatprep.subr.mxu0 0.0
    %79 = vmatpush1.msra.mxu0 0.0
    %80 = vmatprep.subr.mxu0 0.0
    %81 = vmatpush1.msra.mxu0 0.0
    %82 = vmatprep.subr.mxu0 0.0
    %83 = vmatpush1.msra.mxu0 0.0
    %84 = vmatprep.subr.mxu0 0.0
    %85 = vmatpush1.msra.mxu0 %v48
    %86 = vmatprep.subr.mxu0 0.0
    %87 = vmatpush1.msra.mxu0 %v47
    %88 = vmatprep.subr.mxu0 0.0
    %89 = vmatpush1.msra.mxu0 %v46
    %90 = vmatprep.subr.mxu0 0.0
    %91 = vmatpush1.msra.mxu0 %v45
    %92 = vmatprep.subr.mxu0 0.0
    %93 = vmatpush2.msra.mxu0 0.0
    %94 = vmatprep.subr.mxu0 0.0
    %95 = vmatpush2.msra.mxu0 0.0
    %96 = vmatprep.subr.mxu0 0.0
    %97 = vmatpush2.msra.mxu0 0.0
    %98 = vmatprep.subr.mxu0 0.0
    %99 = vmatpush2.msra.mxu0 0.0
    %100 = vmatprep.subr.mxu0 0.0
    %101 = vmatpush2.msra.mxu0 0.0
    %102 = vmatprep.subr.mxu0 0.0
    %103 = vmatpush2.msra.mxu0 0.0
    %104 = vmatprep.subr.mxu0 0.0
    %105 = vmatpush2.msra.mxu0 0.0
    %106 = vmatprep.subr.mxu0 0.0
    %107 = vmatpush2.msra.mxu0 0.0
    %108 = vmatprep.subr.mxu0 0.0
    %109 = vmatpush2.msra.mxu0 0.0
    %110 = vmatprep.subr.mxu0 0.0
    %111 = vmatpush2.msra.mxu0 0.0
    %112 = vmatprep.subr.mxu0 0.0
    %113 = vmatpush2.msra.mxu0 0.0
    %114 = vmatprep.subr.mxu0 0.0
    %115 = vmatpush2.msra.mxu0 0.0
    %116 = vmatprep.subr.mxu0 0.0
    %117 = vmatpush2.msra.mxu0 0.0
    %118 = vmatprep.subr.mxu0 0.0
    %119 = vmatpush2.msra.mxu0 0.0
    %120 = vmatprep.subr.mxu0 0.0
    %121 = vmatpush2.msra.mxu0 0.0
    %122 = vmatprep.subr.mxu0 0.0
    %123 = vmatpush2.msra.mxu0 0.0
    %124 = vmatprep.mubr.f32.mxu0 0.0
    %125 = vmatmul.mubr.f32.gmra.mxu0 %v58
    %v126 = vpop.f32.mrf.mxu0
    %v127 = vadd.f32 %v54, %v126
    %v128 = vpop.f32.mrf.mxu0
    %129 = vdwg.mxu0
    %v130 = vld [vmem:[%s3] sm:$0x1]
    %vm131 = vcmp.ne.f32.partialorder %v130, 0.0
    %v132 = vand.u32 2147483647, %v127
    %vm133 = vcmp.le.f32.partialorder %v132, 0.7853982
    %vm134 = vcmp.lt.s32.totalorder %v127, 0
    %v135 = vand.u32 %v127, 2139095040
    %v136 = vshrl.u32 %v135, 23
    %v137 = vsub.s32 %v136, 127
    %v138 = vand.u32 2147483647, %v127
    %v139 = vand.u32 %v138, 8388607
    %v140 = vor.u32 %v139, 8388608
    %v141 = vsub.s32 0, %v140
    %v142 = vadd.s32 %v137, 1
    %vm143 = vcmp.gt.s32.totalorder %v142, 0
    %v144 = vsel %vm143, %v142, 0
    %v145 = vshrl.u32 %v144, 5
    %v146 = vand.u32 %v144, 31
    %v147 = vsub.s32 32, %v146
    %v148 = vshrl.u32 683565275, %v147
    %v149 = vshll.u32 683565275, %v146
    %v150 = vshrl.u32 2475754826, %v147
    %v151 = vor.u32 %v149, %v150
    %v152 = vshll.u32 2475754826, %v146
    %v153 = vshrl.u32 2131351028, %v147
    %v154 = vor.u32 %v152, %v153
    %v155 = vshll.u32 2131351028, %v146
    %v156 = vshrl.u32 2102212464, %v147
    %v157 = vor.u32 %v155, %v156
    %v158 = vshll.u32 2102212464, %v146
    %v159 = vshrl.u32 920167782, %v147
    %v160 = vor.u32 %v158, %v159
    %v161 = vshll.u32 920167782, %v146
    %v162 = vshrl.u32 1326507024, %v147
    %v163 = vor.u32 %v161, %v162
    %vm164 = vcmp.lt.s32.totalorder %v145, 1
    %vm165 = vcmp.lt.s32.totalorder %v145, 2
    %vm166 = vcmp.lt.s32.totalorder %v145, 3
    %vm167 = vcmp.lt.s32.totalorder %v145, 4
    %v168 = vsel %vm164, %v148, %v151
    %v169 = vsel %vm167, %v157, 2102212464
    %v170 = vsel %vm166, %v154, %v169
    %v171 = vsel %vm165, %v168, %v170
    %v172 = vsel %vm164, %v151, %v154
    %v173 = vsel %vm167, %v160, 920167782
    %v174 = vsel %vm166, %v157, %v173
    %v175 = vsel %vm165, %v172, %v174
    %v176 = vsel %vm164, %v154, %v157
    %v177 = vsel %vm167, %v163, 1326507024
    %v178 = vsel %vm166, %v160, %v177
    %v179 = vsel %vm165, %v176, %v178
    %v180 = vshll.u32 %v140, 8
    %v181 = vmul.u32.u64.compose %v180, %v179
    %v182 = vextract.low.u32 %v181
    %v183 = vextract.high.u32 %v181
    %v184 = vmul.u32.u64.compose %v180, %v175
    %v185 = vextract.low.u32 %v184
    %v186 = vextract.high.u32 %v184
    %v187 = vmul.u32 %v180, %v171
    %v188 = vadd.s32 %v183, %v185
    %vm189 = vc.u32 %v183, %v185
    %v190 = vadd.s32 %v186, 1
    %v191 = vsel %vm189, %v190, %v186
    %v192 = vadd.s32 %v187, %v191
    %v193 = vadd.s32 %v192, 536870912
    %v194 = vshrl.u32 %v193, 30
    %v195 = vshll.u32 %v194, 30
    %v196 = vsub.s32 %v192, %v195
    %vm197 = vcmp.lt.s32.totalorder %v196, 0
    %v198 = vsub.s32 0, %v196
    %v199 = vsel %vm197, %v198, %v196
    %v200 = vclz %v199
    %v201 = vsub.s32 %v200, 2
    %vm202 = vcmp.gt.s32.totalorder 0, %v201
    %v203 = vsel %vm202, 0, %v201
    %v204 = vsub.s32 32, %v203
    %v205 = vshll.u32 %v196, %v203
    %v206 = vshrl.u32 %v188, %v204
    %v207 = vor.u32 %v205, %v206
    %v208 = vsub.s32 4294967266, %v203
    %v209 = vadd.s32 %v208, 127
    %v210 = vshll.u32 %v209, 23
    %v211 = vor.u32 4788187, %v210
    %v212 = vand.u32 2147483647, %v211
    %v214 = vcvt.s32.f32 %v207
    %v215 = vmul.f32 %v214, %v212
    %v216 = vxor.u32 %v215, 2147483648
    %v217 = vsel %vm134, %v216, %v215
    %v218 = vsub.s32 4, %v194
    %v219 = vsel %vm134, %v218, %v194
    %v220 = vsel %vm133, %v127, %v217
    %v221 = vsel %vm133, 0, %v219
    %v222 = vcosq.f32.pop %v220
    %v223 = vsinq.f32.pop %v220
    %vm224 = vweird.f32 %v127
    %v225 = vadd.s32 %v221, 3
    %v226 = vand.u32 %v225, 3
    %vm227 = vcmp.lt.s32.totalorder %v226, 2
    %vm228 = vcmp.eq.s32.totalorder %v226, 0
    %v229 = vxor.u32 %v223, 2147483648
    %v230 = vsel %vm228, %v222, %v229
    %vm231 = vcmp.eq.s32.totalorder %v226, 2
    %v232 = vxor.u32 %v222, 2147483648
    %v233 = vsel %vm231, %v232, %v223
    %v234 = vsel %vm227, %v230, %v233
    %v235 = vsel %vm224, nan, %v234
    %v236 = vsel %vm131, 1, 0
    %v237 = vlaneseq
    %v238 = vshrl.u32 %v237, 7
    %v239 = vsub.s32 0, %v238
    %v240 = vrot.slane %v236, %v239
    %vm241 = vcmp.eq.s32.totalorder %v240, 1
    %v242 = vsel %vm241, %v235, %v127
    %243 = vst [vmem:[#allocation7] sm:$0x3] %v242
    // Predicated region
    $region26: #{tpu_custom_call.1} parent=1 // pred_check
      _
    $region27: #{tpu_custom_call.1} parent=1 // pred_check_branch
      %245 = sbr.rel (0) target = $region29
    $region28: #{tpu_custom_call.1} parent=1 // pred_region
      %s247 = ssub.s32 32, 32
      %248 = vsyncadd [#allocation4], %s247
      %s250 = sshll.u32 [#allocation7], 4
      %s251 = int_to_ptr.vmem [resolvable:$true] %s250
      %253 = dma.vmem_to_hbm [thread:$0]  %s251, 32, %s4, [#allocation4]
    $region29: #{tpu_custom_call.1} parent=1 // pred_fallthru
      _
    // Predicated region
    $region30: #{tpu_custom_call.1} parent=1 // pred_check
      _
    $region31: #{tpu_custom_call.1} parent=1 // pred_check_branch
      %255 = sbr.rel (0) target = $region33
    $region32: #{tpu_custom_call.1} parent=1 // pred_region
      %256 = dma.done [#allocation4], 32
    $region33: #{tpu_custom_call.1} parent=1 // pred_fallthru
      _
    %257 = vsyncpa [#allocation3], 1
    %258 = vsyncpa [#allocation6], 1
    %259 = vsyncpa [#allocation4], 1

</llo_original>
